<compile_context>
chip_gen: v6e
topology: v6e:2x2x1
jax: 0.10.0
libtpu: 0.0.40
codegen_flags: <defaults>
</compile_context>

<pallas_src>
import jax
import jax.numpy as jnp
from jax.experimental import pallas as pl
from jax.experimental.pallas import tpu as pltpu


def mlp_kernel(x_ref, w1_ref, b1_ref, w2_ref, b2_ref, o_ref):
    # In-kernel activation cast: a VPU pack that hides under the x DMA instead
    # of a separate wrapper-side XLA pass over x in HBM.
    x = x_ref[...].astype(w1_ref.dtype)
    # First linear: MXU matmul, f32 accumulation.
    h = jnp.dot(x, w1_ref[...], preferred_element_type=jnp.float32)
    # Bias add + ReLU in f32 on the VPU.
    h = jnp.maximum(h + b1_ref[...], 0.0)
    # Second linear: feed activations back to the MXU in the weights' dtype.
    y = jnp.dot(h.astype(w2_ref.dtype), w2_ref[...],
                preferred_element_type=jnp.float32)
    o_ref[...] = (y + b2_ref[...]).astype(o_ref.dtype)


def _num_tensorcores_per_chip():
    """v7x exposes 2 TensorCores per chip; v5e/v6e expose 1."""
    try:
        kind = jax.devices()[0].device_kind.lower()
    except Exception:
        return 1
    return 2 if ("v7" in kind or "7x" in kind) else 1


def _pick_batch_tile(B, per_row_bytes, num_cores, vmem_row_budget=12 << 20):
    """Pick the batch tile that minimizes grid steps per TensorCore.

    1-TC chips (v5e/v6e): whole batch in one step when it fits VMEM.
    2-TC chips (v7x): exactly one step per core (grid length = 2) when possible.
    Every returned tile satisfies the (8,128) block rule (tb % 8 == 0 or tb == B).
    """
    cap = max(8, vmem_row_budget // max(per_row_bytes, 1))
    # 1) Fewest steps: one per TensorCore.
    if B % num_cores == 0:
        tb = B // num_cores
        if tb <= cap and (tb % 8 == 0 or tb == B):
            return tb
    # 2) Largest 8-aligned divisor of B within the VMEM cap, preferring a grid
    #    length that's a multiple of num_cores (keeps both v7x cores busy).
    candidates = [t for t in (4096, 2048, 1024, 512, 384, 256, 128, 64, 32, 16, 8)
                  if t <= cap]
    for tb in candidates:
        if B % tb == 0 and (B // tb) % num_cores == 0:
            return tb
    for tb in candidates:
        if B % tb == 0:
            return tb
    # 3) Fall back to a single whole-batch block (always layout-legal).
    return B


def _vmem_limit_bytes(tb, D, H, O, x_item, w_item, out_item):
    """Tight scoped-VMEM reservation: actual double-buffered need + headroom."""
    rup = lambda v, m: ((v + m - 1) // m) * m
    Dp, Hp, Op = rup(D, 128), rup(H, 128), rup(O, 128)
    tbp = rup(tb, 8)
    need = 2 * (tbp * Dp * x_item            # x tiles (double-buffered)
                + tbp * Op * out_item        # out tiles (double-buffered)
                + Dp * Hp * w_item           # W1^T (resident)
                + Hp * Op * w_item           # W2^T (resident)
                + 8 * (Hp + Op) * 4)         # biases (padded rows)
    return int(min(32 << 20, max(4 << 20, need * 3 // 2 + (1 << 20))))


def mlp_forward(x, w1_t, b1, w2_t, b2, *, tb=None, out_dtype=jnp.float32):
    """Fused two-layer MLP forward in a single pallas_call.

    x:    [B, D_in]   (f32; cast to the weights' dtype inside the kernel)
    w1_t: [D_in, H]   (pre-transposed / pre-cast via prepare_mlp_params)
    b1:   [H]         (f32)
    w2_t: [H, D_out]
    b2:   [D_out]     (f32)
    """
    B, D = x.shape
    Dw, H = w1_t.shape
    Hw, O = w2_t.shape
    assert D == Dw and H == Hw, "parameter shapes do not match input"

    out_item = jnp.dtype(out_dtype).itemsize
    w_item = jnp.dtype(w1_t.dtype).itemsize
    x_item = jnp.dtype(x.dtype).itemsize

    if tb is None:
        per_row = 2 * (D * x_item + max(O, 128) * out_item)
        tb = _pick_batch_tile(B, per_row, _num_tensorcores_per_chip())
    assert B % tb == 0, "batch must be divisible by the batch tile"

    b1_2d = b1.astype(jnp.float32).reshape(1, H)
    b2_2d = b2.astype(jnp.float32).reshape(1, O)

    bytes_accessed = (x.size * x_item
                      + w1_t.size * w_item + w2_t.size * w_item
                      + (H + O) * 4
                      + B * O * out_item)
    cost = pl.CostEstimate(
        flops=2 * B * (D * H + H * O),
        transcendentals=0,
        bytes_accessed=bytes_accessed,
    )

    grid = (B // tb,)
    return pl.pallas_call(
        mlp_kernel,
        out_shape=jax.ShapeDtypeStruct((B, O), out_dtype),
        grid_spec=pltpu.PrefetchScalarGridSpec(
            num_scalar_prefetch=0,
            grid=grid,
            in_specs=[
                pl.BlockSpec((tb, D), lambda i: (i, 0)),   # x tile (streamed)
                # Constant index_maps -> fetched once, resident in VMEM.
                pl.BlockSpec((D, H), lambda i: (0, 0)),    # W1^T
                pl.BlockSpec((1, H), lambda i: (0, 0)),    # b1
                pl.BlockSpec((H, O), lambda i: (0, 0)),    # W2^T
                pl.BlockSpec((1, O), lambda i: (0, 0)),    # b2
            ],
            out_specs=pl.BlockSpec((tb, O), lambda i: (i, 0)),
        ),
        compiler_params=pltpu.CompilerParams(
            dimension_semantics=("parallel",),
            vmem_limit_bytes=_vmem_limit_bytes(tb, D, H, O,
                                               x_item, w_item, out_item),
        ),
        cost_estimate=cost,
    )(x, w1_t, b1_2d, w2_t, b2_2d)


def init_linear_params(key, in_dim, out_dim):
    """torch.nn.Linear-style init: uniform(+/-1/sqrt(fan_in)), weight (out, in)."""
    kw, kb = jax.random.split(key)
    bound = 1.0 / jnp.sqrt(jnp.float32(in_dim))
    w = jax.random.uniform(kw, (out_dim, in_dim), jnp.float32, -bound, bound)
    b = jax.random.uniform(kb, (out_dim,), jnp.float32, -bound, bound)
    return w, b


def prepare_mlp_params(w1, b1, w2, b2, compute_dtype=jnp.bfloat16):
    """One-time parameter prep: transpose to [in, out] and cast the matmul
    operands to the compute dtype (biases stay f32). Done once, not per call."""
    return (w1.T.astype(compute_dtype), b1.astype(jnp.float32),
            w2.T.astype(compute_dtype), b2.astype(jnp.float32))


if __name__ == "__main__":
    # 'MLP' variant at the module's default dims, small batch:
    #   Linear(768, 128) -> ReLU -> Linear(128, 1000)
    B, INPUT_DIM, HIDDEN, OUTPUT_DIM = 16, 768, 128, 1000

    key = jax.random.PRNGKey(0)
    kx, k1, k2 = jax.random.split(key, 3)

    x = jax.random.normal(kx, (B, INPUT_DIM), jnp.float32)
    w1, b1 = init_linear_params(k1, INPUT_DIM, HIDDEN)     # torch layout (out, in)
    w2, b2 = init_linear_params(k2, HIDDEN, OUTPUT_DIM)

    w1_t, b1p, w2_t, b2p = prepare_mlp_params(w1, b1, w2, b2)

    out = mlp_forward(x, w1_t, b1p, w2_t, b2p)
    out = jax.block_until_ready(out)

    # Reference (plain JAX) mirroring the kernel's bf16 matmul-operand casts.
    xb = x.astype(jnp.bfloat16).astype(jnp.float32)
    w1b = w1_t.astype(jnp.float32)
    w2b = w2_t.astype(jnp.float32)
    h_ref = jnp.maximum(xb @ w1b + b1, 0.0)
    ref = h_ref.astype(jnp.bfloat16).astype(jnp.float32) @ w2b + b2

    assert out.shape == (B, OUTPUT_DIM)
    assert out.dtype == jnp.float32
    assert jnp.allclose(out, ref, atol=2e-2, rtol=2e-2), "mismatch vs reference"

    print("KERNEL_OK")
</pallas_src>

<mosaic_0001>
module attributes {stable_mosaic.version = 11 : i64} {
  func.func @mlp_kernel(%arg0: i32, %arg1: memref<16x768xf32, #tpu.memory_space<vmem>>, %arg2: memref<768x128xbf16, #tpu.memory_space<vmem>>, %arg3: memref<1x128xf32, #tpu.memory_space<vmem>>, %arg4: memref<128x1000xbf16, #tpu.memory_space<vmem>>, %arg5: memref<1x1000xf32, #tpu.memory_space<vmem>>, %arg6: memref<16x1000xf32, #tpu.memory_space<vmem>>) attributes {dimension_semantics = [#tpu.dimension_semantics<parallel>], iteration_bounds = array<i64: 1>, scalar_prefetch = 0 : i64, scratch_operands = 0 : i64, tpu.core_type = #tpu.core_type<tc>, window_params = [{transform_indices = @transform_0, window_bounds = array<i64: 16, 768>}, {pipeline_mode = #tpu.pipeline_mode<synchronous>, transform_indices = @transform_1, window_bounds = array<i64: 768, 128>}, {pipeline_mode = #tpu.pipeline_mode<synchronous>, transform_indices = @transform_2, window_bounds = array<i64: 1, 128>}, {pipeline_mode = #tpu.pipeline_mode<synchronous>, transform_indices = @transform_3, window_bounds = array<i64: 128, 1000>}, {pipeline_mode = #tpu.pipeline_mode<synchronous>, transform_indices = @transform_4, window_bounds = array<i64: 1, 1000>}, {transform_indices = @transform_5, window_bounds = array<i64: 16, 1000>}]} {
    %c0 = arith.constant 0 : index
    %c0_0 = arith.constant 0 : index
    %0 = vector.load %arg1[%c0, %c0_0] : memref<16x768xf32, #tpu.memory_space<vmem>>, vector<16x768xf32>
    %1 = arith.truncf %0 : vector<16x768xf32> to vector<16x768xbf16>
    %c0_1 = arith.constant 0 : index
    %c0_2 = arith.constant 0 : index
    %2 = vector.load %arg2[%c0_1, %c0_2] : memref<768x128xbf16, #tpu.memory_space<vmem>>, vector<768x128xbf16>
    %cst = arith.constant dense<0.000000e+00> : vector<16x128xf32>
    %3 = tpu.matmul %1, %2, %cst {dimension_numbers = #tpu.dot_dimension_numbers<[1], [0], [0], [1], [0, 0, 1, 1], [], []>} : vector<16x768xbf16>, vector<768x128xbf16>, vector<16x128xf32> -> vector<16x128xf32>
    %c0_3 = arith.constant 0 : index
    %c0_4 = arith.constant 0 : index
    %4 = vector.load %arg3[%c0_3, %c0_4] : memref<1x128xf32, #tpu.memory_space<vmem>>, vector<1x128xf32>
    %5 = vector.broadcast %4 : vector<1x128xf32> to vector<16x128xf32>
    %6 = arith.addf %3, %5 : vector<16x128xf32>
    %cst_5 = arith.constant 0.000000e+00 : f32
    %7 = vector.broadcast %cst_5 : f32 to vector<16x128xf32>
    %8 = arith.maximumf %6, %7 : vector<16x128xf32>
    %9 = arith.truncf %8 : vector<16x128xf32> to vector<16x128xbf16>
    %c0_6 = arith.constant 0 : index
    %c0_7 = arith.constant 0 : index
    %10 = vector.load %arg4[%c0_6, %c0_7] : memref<128x1000xbf16, #tpu.memory_space<vmem>>, vector<128x1000xbf16>
    %cst_8 = arith.constant dense<0.000000e+00> : vector<16x1000xf32>
    %11 = tpu.matmul %9, %10, %cst_8 {dimension_numbers = #tpu.dot_dimension_numbers<[1], [0], [0], [1], [0, 0, 1, 1], [], []>} : vector<16x128xbf16>, vector<128x1000xbf16>, vector<16x1000xf32> -> vector<16x1000xf32>
    %c0_9 = arith.constant 0 : index
    %c0_10 = arith.constant 0 : index
    %12 = vector.load %arg5[%c0_9, %c0_10] : memref<1x1000xf32, #tpu.memory_space<vmem>>, vector<1x1000xf32>
    %13 = vector.broadcast %12 : vector<1x1000xf32> to vector<16x1000xf32>
    %14 = arith.addf %11, %13 : vector<16x1000xf32>
    %c0_11 = arith.constant 0 : index
    %c0_12 = arith.constant 0 : index
    %15 = vector.load %arg6[%c0_11, %c0_12] : memref<16x1000xf32, #tpu.memory_space<vmem>>, vector<16x1000xf32>
    tpu.vector_store %arg6[%c0_11, %c0_12], %14 {strides = array<i32>} : memref<16x1000xf32, #tpu.memory_space<vmem>>, vector<16x1000xf32>,
    return
  }
  func.func @transform_0(%arg0: i32) -> (i32, i32) {
    %c0_i32 = arith.constant 0 : i32
    %c0_i32_0 = arith.constant 0 : i32
    return %arg0, %c0_i32 : i32, i32
  }
  func.func @transform_1(%arg0: i32) -> (i32, i32) {
    %c0_i32 = arith.constant 0 : i32
    %c0_i32_0 = arith.constant 0 : i32
    %c0_i32_1 = arith.constant 0 : i32
    return %c0_i32, %c0_i32_0 : i32, i32
  }
  func.func @transform_2(%arg0: i32) -> (i32, i32) {
    %c0_i32 = arith.constant 0 : i32
    %c0_i32_0 = arith.constant 0 : i32
    %c0_i32_1 = arith.constant 0 : i32
    return %c0_i32, %c0_i32_0 : i32, i32
  }
  func.func @transform_3(%arg0: i32) -> (i32, i32) {
    %c0_i32 = arith.constant 0 : i32
    %c0_i32_0 = arith.constant 0 : i32
    %c0_i32_1 = arith.constant 0 : i32
    return %c0_i32, %c0_i32_0 : i32, i32
  }
  func.func @transform_4(%arg0: i32) -> (i32, i32) {
    %c0_i32 = arith.constant 0 : i32
    %c0_i32_0 = arith.constant 0 : i32
    %c0_i32_1 = arith.constant 0 : i32
    return %c0_i32, %c0_i32_0 : i32, i32
  }
  func.func @transform_5(%arg0: i32) -> (i32, i32) {
    %c0_i32 = arith.constant 0 : i32
    %c0_i32_0 = arith.constant 0 : i32
    return %arg0, %c0_i32 : i32, i32
  }
}

</mosaic_0001>

<llo_original>
// kernel: tpu_custom_call.1
$region0: #{tpu_custom_call.1}
  #allocation0 [shape = 'u32[]', space=smem, size = 0x4, offset = 0x4, fixed_abs, tag = 'smem constant byte address 0x4 - core index']
  #allocation1 [shape = 'u32[144,128]{1,0:T(1,128)}', space=vmem, size = 0x12000, scoped, tag = 'internal scratch']
  %s0 = inlined_call_operand.vmem [shape: f32[16,768], index: 0, kind: input, shape index: {}]
  %s1 = inlined_call_operand.vmem [shape: bf16[768,128], index: 1, kind: input, shape index: {}]
  %s2 = inlined_call_operand.vmem [shape: f32[1,128], index: 2, kind: input, shape index: {}]
  %s3 = inlined_call_operand.vmem [shape: bf16[128,1000], index: 3, kind: input, shape index: {}]
  %s4 = inlined_call_operand.vmem [shape: f32[1,1000], index: 4, kind: input, shape index: {}]
  %s5 = inlined_call_operand.hbm [shape: f32[16,1000], index: 5, kind: output, shape index: {}]
  %s6 = sld [smem:[#allocation0]]
  $region30: #{tpu_custom_call.1} parent=0
    _
  %s8 = ssub.s32 1, %s6
  %s9 = scalar_select 0, %s8, %s6
  $region1: #{tpu_custom_call.1} parent=0
    #allocation2 [shape = 'u8[65536]{0}', space=vmem, size = 0x10000, scoped, tag = 'output window, operand 0, single buffered']
    #allocation3 [shape = 's32[1]{0}', space=sflag, size = 0x4, scoped, tag = 'scoped memory for tpu_custom_call.1']
    %10 = vsyncpa [#allocation3], 0
    // Predicated region
    $region2: #{tpu_custom_call.1} parent=1 // pred_check
      _
    $region3: #{tpu_custom_call.1} parent=1 // pred_check_branch
      %12 = sbr.rel (0) target = $region5
    $region4: #{tpu_custom_call.1} parent=1 // pred_region
      _
    $region5: #{tpu_custom_call.1} parent=1 // pred_fallthru
      _
    // Predicated region
    $region6: #{tpu_custom_call.1} parent=1 // pred_check
      _
    $region7: #{tpu_custom_call.1} parent=1 // pred_check_branch
      %14 = sbr.rel (0) target = $region9
    $region8: #{tpu_custom_call.1} parent=1 // pred_region
      _
    $region9: #{tpu_custom_call.1} parent=1 // pred_fallthru
      _
    // Predicated region
    $region10: #{tpu_custom_call.1} parent=1 // pred_check
      _
    $region11: #{tpu_custom_call.1} parent=1 // pred_check_branch
      %16 = sbr.rel (0) target = $region13
    $region12: #{tpu_custom_call.1} parent=1 // pred_region
      _
    $region13: #{tpu_custom_call.1} parent=1 // pred_fallthru
      _
    // Predicated region
    $region14: #{tpu_custom_call.1} parent=1 // pred_check
      _
    $region15: #{tpu_custom_call.1} parent=1 // pred_check_branch
      %18 = sbr.rel (0) target = $region17
    $region16: #{tpu_custom_call.1} parent=1 // pred_region
      _
    $region17: #{tpu_custom_call.1} parent=1 // pred_fallthru
      _
    // Predicated region
    $region18: #{tpu_custom_call.1} parent=1 // pred_check
      _
    $region19: #{tpu_custom_call.1} parent=1 // pred_check_branch
      %20 = sbr.rel (0) target = $region21
    $region20: #{tpu_custom_call.1} parent=1 // pred_region
      _
    $region21: #{tpu_custom_call.1} parent=1 // pred_fallthru
      _
    %v22 = vld [vmem:[%s0] sm:$0xff]
    %v23 = vld [vmem:[%s0 + $0x8] sm:$0xff]
    %v24 = vld [vmem:[%s0 + $0x10] sm:$0xff]
    %v25 = vld [vmem:[%s0 + $0x18] sm:$0xff]
    %v26 = vld [vmem:[%s0 + $0x20] sm:$0xff]
    %v27 = vld [vmem:[%s0 + $0x28] sm:$0xff]
    %v28 = vld [vmem:[%s0 + $0x30] sm:$0xff]
    %v29 = vld [vmem:[%s0 + $0x38] sm:$0xff]
    %v30 = vld [vmem:[%s0 + $0x40] sm:$0xff]
    %v31 = vld [vmem:[%s0 + $0x48] sm:$0xff]
    %v32 = vld [vmem:[%s0 + $0x50] sm:$0xff]
    %v33 = vld [vmem:[%s0 + $0x58] sm:$0xff]
    %v34 = vpack.c.bf16 %v28, %v22
    %v35 = vpack.c.bf16 %v29, %v23
    %v36 = vpack.c.bf16 %v30, %v24
    %v37 = vpack.c.bf16 %v31, %v25
    %v38 = vpack.c.bf16 %v32, %v26
    %v39 = vpack.c.bf16 %v33, %v27
    %v40 = vld [vmem:[%s1] sm:$0xf]
    %v41 = vld [vmem:[%s1 + $0x4] sm:$0xf]
    %v42 = vld [vmem:[%s1 + $0x8] sm:$0xf]
    %v43 = vld [vmem:[%s1 + $0xc] sm:$0xf]
    %v44 = vld [vmem:[%s1 + $0x10] sm:$0xf]
    %v45 = vld [vmem:[%s1 + $0x14] sm:$0xf]
    %v46 = vld [vmem:[%s1 + $0x18] sm:$0xf]
    %v47 = vld [vmem:[%s1 + $0x1c] sm:$0xf]
    %v48 = vld [vmem:[%s1 + $0x20] sm:$0xf]
    %v49 = vld [vmem:[%s1 + $0x24] sm:$0xf]
    %v50 = vld [vmem:[%s1 + $0x28] sm:$0xf]
    %v51 = vld [vmem:[%s1 + $0x2c] sm:$0xf]
    %v52 = vld [vmem:[%s1 + $0x30] sm:$0xf]
    %v53 = vld [vmem:[%s1 + $0x34] sm:$0xf]
    %v54 = vld [vmem:[%s1 + $0x38] sm:$0xf]
    %v55 = vld [vmem:[%s1 + $0x3c] sm:$0xf]
    %v56 = vld [vmem:[%s1 + $0x40] sm:$0xf]
    %v57 = vld [vmem:[%s1 + $0x44] sm:$0xf]
    %v58 = vld [vmem:[%s1 + $0x48] sm:$0xf]
    %v59 = vld [vmem:[%s1 + $0x4c] sm:$0xf]
    %v60 = vld [vmem:[%s1 + $0x50] sm:$0xf]
    %v61 = vld [vmem:[%s1 + $0x54] sm:$0xf]
    %v62 = vld [vmem:[%s1 + $0x58] sm:$0xf]
    %v63 = vld [vmem:[%s1 + $0x5c] sm:$0xf]
    %v64 = vld [vmem:[%s1 + $0x60] sm:$0xf]
    %v65 = vld [vmem:[%s1 + $0x64] sm:$0xf]
    %v66 = vld [vmem:[%s1 + $0x68] sm:$0xf]
    %v67 = vld [vmem:[%s1 + $0x6c] sm:$0xf]
    %v68 = vld [vmem:[%s1 + $0x70] sm:$0xf]
    %v69 = vld [vmem:[%s1 + $0x74] sm:$0xf]
    %v70 = vld [vmem:[%s1 + $0x78] sm:$0xf]
    %v71 = vld [vmem:[%s1 + $0x7c] sm:$0xf]
    %v72 = vld [vmem:[%s1 + $0x80] sm:$0xf]
    %v73 = vld [vmem:[%s1 + $0x84] sm:$0xf]
    %v74 = vld [vmem:[%s1 + $0x88] sm:$0xf]
    %v75 = vld [vmem:[%s1 + $0x8c] sm:$0xf]
    %v76 = vld [vmem:[%s1 + $0x90] sm:$0xf]
    %v77 = vld [vmem:[%s1 + $0x94] sm:$0xf]
    %v78 = vld [vmem:[%s1 + $0x98] sm:$0xf]
    %v79 = vld [vmem:[%s1 + $0x9c] sm:$0xf]
    %v80 = vld [vmem:[%s1 + $0xa0] sm:$0xf]
    %v81 = vld [vmem:[%s1 + $0xa4] sm:$0xf]
    %v82 = vld [vmem:[%s1 + $0xa8] sm:$0xf]
    %v83 = vld [vmem:[%s1 + $0xac] sm:$0xf]
    %v84 = vld [vmem:[%s1 + $0xb0] sm:$0xf]
    %v85 = vld [vmem:[%s1 + $0xb4] sm:$0xf]
    %v86 = vld [vmem:[%s1 + $0xb8] sm:$0xf]
    %v87 = vld [vmem:[%s1 + $0xbc] sm:$0xf]
    %v88 = vld [vmem:[%s1 + $0xc0] sm:$0xf]
    %v89 = vld [vmem:[%s1 + $0xc4] sm:$0xf]
    %v90 = vld [vmem:[%s1 + $0xc8] sm:$0xf]
    %v91 = vld [vmem:[%s1 + $0xcc] sm:$0xf]
    %v92 = vld [vmem:[%s1 + $0xd0] sm:$0xf]
    %v93 = vld [vmem:[%s1 + $0xd4] sm:$0xf]
    %v94 = vld [vmem:[%s1 + $0xd8] sm:$0xf]
    %v95 = vld [vmem:[%s1 + $0xdc] sm:$0xf]
    %v96 = vld [vmem:[%s1 + $0xe0] sm:$0xf]
    %v97 = vld [vmem:[%s1 + $0xe4] sm:$0xf]
    %v98 = vld [vmem:[%s1 + $0xe8] sm:$0xf]
    %v99 = vld [vmem:[%s1 + $0xec] sm:$0xf]
    %v100 = vld [vmem:[%s1 + $0xf0] sm:$0xf]
    %v101 = vld [vmem:[%s1 + $0xf4] sm:$0xf]
    %v102 = vld [vmem:[%s1 + $0xf8] sm:$0xf]
    %v103 = vld [vmem:[%s1 + $0xfc] sm:$0xf]
    %v104 = vld [vmem:[%s1 + $0x100] sm:$0xf]
    %v105 = vld [vmem:[%s1 + $0x104] sm:$0xf]
    %v106 = vld [vmem:[%s1 + $0x108] sm:$0xf]
    %v107 = vld [vmem:[%s1 + $0x10c] sm:$0xf]
    %v108 = vld [vmem:[%s1 + $0x110] sm:$0xf]
    %v109 = vld [vmem:[%s1 + $0x114] sm:$0xf]
    %v110 = vld [vmem:[%s1 + $0x118] sm:$0xf]
    %v111 = vld [vmem:[%s1 + $0x11c] sm:$0xf]
    %v112 = vld [vmem:[%s1 + $0x120] sm:$0xf]
    %v113 = vld [vmem:[%s1 + $0x124] sm:$0xf]
    %v114 = vld [vmem:[%s1 + $0x128] sm:$0xf]
    %v115 = vld [vmem:[%s1 + $0x12c] sm:$0xf]
    %v116 = vld [vmem:[%s1 + $0x130] sm:$0xf]
    %v117 = vld [vmem:[%s1 + $0x134] sm:$0xf]
    %v118 = vld [vmem:[%s1 + $0x138] sm:$0xf]
    %v119 = vld [vmem:[%s1 + $0x13c] sm:$0xf]
    %v120 = vld [vmem:[%s1 + $0x140] sm:$0xf]
    %v121 = vld [vmem:[%s1 + $0x144] sm:$0xf]
    %v122 = vld [vmem:[%s1 + $0x148] sm:$0xf]
    %v123 = vld [vmem:[%s1 + $0x14c] sm:$0xf]
    %v124 = vld [vmem:[%s1 + $0x150] sm:$0xf]
    %v125 = vld [vmem:[%s1 + $0x154] sm:$0xf]
    %v126 = vld [vmem:[%s1 + $0x158] sm:$0xf]
    %v127 = vld [vmem:[%s1 + $0x15c] sm:$0xf]
    %v128 = vld [vmem:[%s1 + $0x160] sm:$0xf]
    %v129 = vld [vmem:[%s1 + $0x164] sm:$0xf]
    %v130 = vld [vmem:[%s1 + $0x168] sm:$0xf]
    %v131 = vld [vmem:[%s1 + $0x16c] sm:$0xf]
    %v132 = vld [vmem:[%s1 + $0x170] sm:$0xf]
    %v133 = vld [vmem:[%s1 + $0x174] sm:$0xf]
    %v134 = vld [vmem:[%s1 + $0x178] sm:$0xf]
    %v135 = vld [vmem:[%s1 + $0x17c] sm:$0xf]
    %v136 = vld [vmem:[%s2] sm:$0x1]
    %v138 = vlaneseq
    %v139 = vshrl.u32 %v138, 7
    %v140 = vsub.s32 0, %v139
    %v141 = vrot.slane %v136, %v140
    %v239 = vunpack.c.l.b16 %v40
    %v240 = vunpack.c.l.b16 %v41
    %v241 = vunpack.c.l.b16 %v42
    %v242 = vunpack.c.l.b16 %v43
    %v243 = vunpack.c.l.b16 %v44
    %v244 = vunpack.c.l.b16 %v45
    %v245 = vunpack.c.l.b16 %v46
    %v246 = vunpack.c.l.b16 %v47
    %v247 = vunpack.c.l.b16 %v48
    %v248 = vunpack.c.l.b16 %v49
    %v249 = vunpack.c.l.b16 %v50
    %v250 = vunpack.c.l.b16 %v51
    %v251 = vunpack.c.l.b16 %v52
    %v252 = vunpack.c.l.b16 %v53
    %v253 = vunpack.c.l.b16 %v54
    %v254 = vunpack.c.l.b16 %v55
    %v255 = vunpack.c.l.b16 %v56
    %v256 = vunpack.c.l.b16 %v57
    %v257 = vunpack.c.l.b16 %v58
    %v258 = vunpack.c.l.b16 %v59
    %v259 = vunpack.c.l.b16 %v60
    %v260 = vunpack.c.l.b16 %v61
    %v261 = vunpack.c.l.b16 %v62
    %v262 = vunpack.c.l.b16 %v63
    %v263 = vunpack.c.l.b16 %v64
    %v264 = vunpack.c.l.b16 %v65
    %v265 = vunpack.c.l.b16 %v66
    %v266 = vunpack.c.l.b16 %v67
    %v267 = vunpack.c.l.b16 %v68
    %v268 = vunpack.c.l.b16 %v69
    %v269 = vunpack.c.l.b16 %v70
    %v270 = vunpack.c.l.b16 %v71
    %v271 = vunpack.c.l.b16 %v72
    %v272 = vunpack.c.l.b16 %v73
    %v273 = vunpack.c.l.b16 %v74
    %v274 = vunpack.c.l.b16 %v75
    %v275 = vunpack.c.l.b16 %v76
    %v276 = vunpack.c.l.b16 %v77
    %v277 = vunpack.c.l.b16 %v78
    %v278 = vunpack.c.l.b16 %v79
    %v279 = vunpack.c.l.b16 %v80
    %v280 = vunpack.c.l.b16 %v81
    %v281 = vunpack.c.l.b16 %v82
    %v282 = vunpack.c.l.b16 %v83
    %v283 = vunpack.c.l.b16 %v84
    %v284 = vunpack.c.l.b16 %v85
    %v285 = vunpack.c.l.b16 %v86
    %v286 = vunpack.c.l.b16 %v87
    %v287 = vunpack.c.l.b16 %v88
    %v288 = vunpack.c.l.b16 %v89
    %v289 = vunpack.c.l.b16 %v90
    %v290 = vunpack.c.l.b16 %v91
    %v291 = vunpack.c.l.b16 %v92
    %v292 = vunpack.c.l.b16 %v93
    %v293 = vunpack.c.l.b16 %v94
    %v294 = vunpack.c.l.b16 %v95
    %v295 = vunpack.c.l.b16 %v96
    %v296 = vunpack.c.l.b16 %v97
    %v297 = vunpack.c.l.b16 %v98
    %v298 = vunpack.c.l.b16 %v99
    %v299 = vunpack.c.l.b16 %v100
    %v300 = vunpack.c.l.b16 %v101
    %v301 = vunpack.c.l.b16 %v102
    %v302 = vunpack.c.l.b16 %v103
    %v303 = vunpack.c.l.b16 %v104
    %v304 = vunpack.c.l.b16 %v105
    %v305 = vunpack.c.l.b16 %v106
    %v306 = vunpack.c.l.b16 %v107
    %v307 = vunpack.c.l.b16 %v108
    %v308 = vunpack.c.l.b16 %v109
    %v309 = vunpack.c.l.b16 %v110
    %v310 = vunpack.c.l.b16 %v111
    %v311 = vunpack.c.l.b16 %v112
    %v312 = vunpack.c.l.b16 %v113
    %v313 = vunpack.c.l.b16 %v114
    %v314 = vunpack.c.l.b16 %v115
    %v315 = vunpack.c.l.b16 %v116
    %v316 = vunpack.c.l.b16 %v117
    %v317 = vunpack.c.l.b16 %v118
    %v318 = vunpack.c.l.b16 %v119
    %v319 = vunpack.c.l.b16 %v120
    %v320 = vunpack.c.l.b16 %v121
    %v321 = vunpack.c.l.b16 %v122
    %v322 = vunpack.c.l.b16 %v123
    %v323 = vunpack.c.l.b16 %v124
    %v324 = vunpack.c.l.b16 %v125
    %v325 = vunpack.c.l.b16 %v126
    %v326 = vunpack.c.l.b16 %v127
    %v327 = vunpack.c.l.b16 %v128
    %v328 = vunpack.c.l.b16 %v129
    %v329 = vunpack.c.l.b16 %v130
    %v330 = vunpack.c.l.b16 %v131
    %v331 = vunpack.c.l.b16 %v132
    %v332 = vunpack.c.l.b16 %v133
    %v333 = vunpack.c.l.b16 %v134
    %v334 = vunpack.c.l.b16 %v135
    %v335 = vpack.c.b16 %v240, %v239
    %v336 = vpack.c.b16 %v242, %v241
    %v337 = vpack.c.b16 %v244, %v243
    %v338 = vpack.c.b16 %v246, %v245
    %v339 = vpack.c.b16 %v248, %v247
    %v340 = vpack.c.b16 %v250, %v249
    %v341 = vpack.c.b16 %v252, %v251
    %v342 = vpack.c.b16 %v254, %v253
    %v343 = vpack.c.b16 %v256, %v255
    %v344 = vpack.c.b16 %v258, %v257
    %v345 = vpack.c.b16 %v260, %v259
    %v346 = vpack.c.b16 %v262, %v261
    %v347 = vpack.c.b16 %v264, %v263
    %v348 = vpack.c.b16 %v266, %v265
    %v349 = vpack.c.b16 %v268, %v267
    %v350 = vpack.c.b16 %v270, %v269
    %v351 = vpack.c.b16 %v272, %v271
    %v352 = vpack.c.b16 %v274, %v273
    %v353 = vpack.c.b16 %v276, %v275
    %v354 = vpack.c.b16 %v278, %v277
    %v355 = vpack.c.b16 %v280, %v279
    %v356 = vpack.c.b16 %v282, %v281
    %v357 = vpack.c.b16 %v284, %v283
    %v358 = vpack.c.b16 %v286, %v285
    %v359 = vpack.c.b16 %v288, %v287
    %v360 = vpack.c.b16 %v290, %v289
    %v361 = vpack.c.b16 %v292, %v291
    %v362 = vpack.c.b16 %v294, %v293
    %v363 = vpack.c.b16 %v296, %v295
    %v364 = vpack.c.b16 %v298, %v297
    %v365 = vpack.c.b16 %v300, %v299
    %v366 = vpack.c.b16 %v302, %v301
    %v367 = vpack.c.b16 %v304, %v303
    %v368 = vpack.c.b16 %v306, %v305
    %v369 = vpack.c.b16 %v308, %v307
    %v370 = vpack.c.b16 %v310, %v309
    %v371 = vpack.c.b16 %v312, %v311
    %v372 = vpack.c.b16 %v314, %v313
    %v373 = vpack.c.b16 %v316, %v315
    %v374 = vpack.c.b16 %v318, %v317
    %v375 = vpack.c.b16 %v320, %v319
    %v376 = vpack.c.b16 %v322, %v321
    %v377 = vpack.c.b16 %v324, %v323
    %v378 = vpack.c.b16 %v326, %v325
    %v379 = vpack.c.b16 %v328, %v327
    %v380 = vpack.c.b16 %v330, %v329
    %v381 = vpack.c.b16 %v332, %v331
    %v382 = vpack.c.b16 %v334, %v333
    %431 = vmatprep.subr.bf16.mxu0 0
    %432 = vmatpush1.bf16.msra.mxu0 %v342
    %433 = vmatprep.subr.bf16.mxu0 0
    %434 = vmatpush1.bf16.msra.mxu0 %v341
    %435 = vmatprep.subr.bf16.mxu0 0
    %436 = vmatpush1.bf16.msra.mxu0 %v340
    %437 = vmatprep.subr.bf16.mxu0 0
    %438 = vmatpush1.bf16.msra.mxu0 %v339
    %439 = vmatprep.subr.bf16.mxu0 0
    %440 = vmatpush1.bf16.msra.mxu0 %v338
    %441 = vmatprep.subr.bf16.mxu0 0
    %442 = vmatpush1.bf16.msra.mxu0 %v337
    %443 = vmatprep.subr.bf16.mxu0 0
    %444 = vmatpush1.bf16.msra.mxu0 %v336
    %445 = vmatprep.subr.bf16.mxu0 0
    %446 = vmatpush1.bf16.msra.mxu0 %v335
    %447 = vmatprep.subr.bf16.mxu0 0
    %448 = vmatpush2.bf16.msra.mxu0 %v350
    %449 = vmatprep.subr.bf16.mxu0 0
    %450 = vmatpush2.bf16.msra.mxu0 %v349
    %451 = vmatprep.subr.bf16.mxu0 0
    %452 = vmatpush2.bf16.msra.mxu0 %v348
    %453 = vmatprep.subr.bf16.mxu0 0
    %454 = vmatpush2.bf16.msra.mxu0 %v347
    %455 = vmatprep.subr.bf16.mxu0 0
    %456 = vmatpush2.bf16.msra.mxu0 %v346
    %457 = vmatprep.subr.bf16.mxu0 0
    %458 = vmatpush2.bf16.msra.mxu0 %v345
    %459 = vmatprep.subr.bf16.mxu0 0
    %460 = vmatpush2.bf16.msra.mxu0 %v344
    %461 = vmatprep.subr.bf16.mxu0 0
    %462 = vmatpush2.bf16.msra.mxu0 %v343
    %463 = vmatprep.mubr.bf16.mxu0 %v35
    %464 = vmatmul.mubr.bf16.gmra.mxu0 %v34
    %v465 = vpop.f32.mrf.mxu0
    %v466 = vadd.f32 %v141, %v465
    %v467 = vpop.f32.mrf.mxu0
    %v468 = vpop.f32.mrf.mxu0
    %v469 = vadd.f32 %v141, %v468
    %v470 = vpop.f32.mrf.mxu0
    %471 = vdwg.mxu0
    %472 = vmatprep.subr.bf16.mxu0 0
    %473 = vmatpush1.bf16.msra.mxu0 %v358
    %474 = vmatprep.subr.bf16.mxu0 0
    %475 = vmatpush1.bf16.msra.mxu0 %v357
    %476 = vmatprep.subr.bf16.mxu0 0
    %477 = vmatpush1.bf16.msra.mxu0 %v356
    %478 = vmatprep.subr.bf16.mxu0 0
    %479 = vmatpush1.bf16.msra.mxu0 %v355
    %480 = vmatprep.subr.bf16.mxu0 0
    %481 = vmatpush1.bf16.msra.mxu0 %v354
    %482 = vmatprep.subr.bf16.mxu0 0
    %483 = vmatpush1.bf16.msra.mxu0 %v353
    %484 = vmatprep.subr.bf16.mxu0 0
    %485 = vmatpush1.bf16.msra.mxu0 %v352
    %486 = vmatprep.subr.bf16.mxu0 0
    %487 = vmatpush1.bf16.msra.mxu0 %v351
    %488 = vmatprep.subr.bf16.mxu0 0
    %489 = vmatpush2.bf16.msra.mxu0 %v366
    %490 = vmatprep.subr.bf16.mxu0 0
    %491 = vmatpush2.bf16.msra.mxu0 %v365
    %492 = vmatprep.subr.bf16.mxu0 0
    %493 = vmatpush2.bf16.msra.mxu0 %v364
    %494 = vmatprep.subr.bf16.mxu0 0
    %495 = vmatpush2.bf16.msra.mxu0 %v363
    %496 = vmatprep.subr.bf16.mxu0 0
    %497 = vmatpush2.bf16.msra.mxu0 %v362
    %498 = vmatprep.subr.bf16.mxu0 0
    %499 = vmatpush2.bf16.msra.mxu0 %v361
    %500 = vmatprep.subr.bf16.mxu0 0
    %501 = vmatpush2.bf16.msra.mxu0 %v360
    %502 = vmatprep.subr.bf16.mxu0 0
    %503 = vmatpush2.bf16.msra.mxu0 %v359
    %504 = vmatprep.mubr.bf16.mxu0 %v37
    %505 = vmatmul.mubr.bf16.gmra.mxu0 %v36
    %v506 = vpop.f32.mrf.mxu0
    %v507 = vadd.f32 %v466, %v506
    %v508 = vpop.f32.mrf.mxu0
    %v509 = vpop.f32.mrf.mxu0
    %v510 = vadd.f32 %v469, %v509
    %v511 = vpop.f32.mrf.mxu0
    %512 = vdwg.mxu0
    %513 = vmatprep.subr.bf16.mxu0 0
    %514 = vmatpush1.bf16.msra.mxu0 %v374
    %515 = vmatprep.subr.bf16.mxu0 0
    %516 = vmatpush1.bf16.msra.mxu0 %v373
    %517 = vmatprep.subr.bf16.mxu0 0
    %518 = vmatpush1.bf16.msra.mxu0 %v372
    %519 = vmatprep.subr.bf16.mxu0 0
    %520 = vmatpush1.bf16.msra.mxu0 %v371
    %521 = vmatprep.subr.bf16.mxu0 0
    %522 = vmatpush1.bf16.msra.mxu0 %v370
    %523 = vmatprep.subr.bf16.mxu0 0
    %524 = vmatpush1.bf16.msra.mxu0 %v369
    %525 = vmatprep.subr.bf16.mxu0 0
    %526 = vmatpush1.bf16.msra.mxu0 %v368
    %527 = vmatprep.subr.bf16.mxu0 0
    %528 = vmatpush1.bf16.msra.mxu0 %v367
    %529 = vmatprep.subr.bf16.mxu0 0
    %530 = vmatpush2.bf16.msra.mxu0 %v382
    %531 = vmatprep.subr.bf16.mxu0 0
    %532 = vmatpush2.bf16.msra.mxu0 %v381
    %533 = vmatprep.subr.bf16.mxu0 0
    %534 = vmatpush2.bf16.msra.mxu0 %v380
    %535 = vmatprep.subr.bf16.mxu0 0
    %536 = vmatpush2.bf16.msra.mxu0 %v379
    %537 = vmatprep.subr.bf16.mxu0 0
    %538 = vmatpush2.bf16.msra.mxu0 %v378
    %539 = vmatprep.subr.bf16.mxu0 0
    %540 = vmatpush2.bf16.msra.mxu0 %v377
    %541 = vmatprep.subr.bf16.mxu0 0
    %542 = vmatpush2.bf16.msra.mxu0 %v376
    %543 = vmatprep.subr.bf16.mxu0 0
    %544 = vmatpush2.bf16.msra.mxu0 %v375
    %545 = vmatprep.mubr.bf16.mxu0 %v39
    %546 = vmatmul.mubr.bf16.gmra.mxu0 %v38
    %v547 = vpop.f32.mrf.mxu0
    %v548 = vadd.f32 %v507, %v547
    %v549 = vpop.f32.mrf.mxu0
    %v550 = vpop.f32.mrf.mxu0
    %v551 = vadd.f32 %v510, %v550
    %v552 = vpop.f32.mrf.mxu0
    %553 = vdwg.mxu0
    %v554 = vmax.f32 %v548, 0.0
    %v555 = vmax.f32 %v551, 0.0
    %v556 = vpack.c.bf16 %v555, %v554
    %v557 = vld [vmem:[%s3] sm:$0xff]
    %v558 = vld [vmem:[%s3 + $0x8] sm:$0xff]
    %v559 = vld [vmem:[%s3 + $0x10] sm:$0xff]
    %v560 = vld [vmem:[%s3 + $0x18] sm:$0xff]
    %v561 = vld [vmem:[%s3 + $0x20] sm:$0xff]
    %v562 = vld [vmem:[%s3 + $0x28] sm:$0xff]
    %v563 = vld [vmem:[%s3 + $0x30] sm:$0xff]
    %v564 = vld [vmem:[%s3 + $0x38] sm:$0xff]
    %v565 = vld [vmem:[%s3 + $0x40] sm:$0xff]
    %v566 = vld [vmem:[%s3 + $0x48] sm:$0xff]
    %v567 = vld [vmem:[%s3 + $0x50] sm:$0xff]
    %v568 = vld [vmem:[%s3 + $0x58] sm:$0xff]
    %v569 = vld [vmem:[%s3 + $0x60] sm:$0xff]
    %v570 = vld [vmem:[%s3 + $0x68] sm:$0xff]
    %v571 = vld [vmem:[%s3 + $0x70] sm:$0xff]
    %v572 = vld [vmem:[%s3 + $0x78] sm:$0xff]
    %v573 = vld [vmem:[%s3 + $0x80] sm:$0xff]
    %v574 = vld [vmem:[%s3 + $0x88] sm:$0xff]
    %v575 = vld [vmem:[%s3 + $0x90] sm:$0xff]
    %v576 = vld [vmem:[%s3 + $0x98] sm:$0xff]
    %v577 = vld [vmem:[%s3 + $0xa0] sm:$0xff]
    %v578 = vld [vmem:[%s3 + $0xa8] sm:$0xff]
    %v579 = vld [vmem:[%s3 + $0xb0] sm:$0xff]
    %v580 = vld [vmem:[%s3 + $0xb8] sm:$0xff]
    %v581 = vld [vmem:[%s3 + $0xc0] sm:$0xff]
    %v582 = vld [vmem:[%s3 + $0xc8] sm:$0xff]
    %v583 = vld [vmem:[%s3 + $0xd0] sm:$0xff]
    %v584 = vld [vmem:[%s3 + $0xd8] sm:$0xff]
    %v585 = vld [vmem:[%s3 + $0xe0] sm:$0xff]
    %v586 = vld [vmem:[%s3 + $0xe8] sm:$0xff]
    %v587 = vld [vmem:[%s3 + $0xf0] sm:$0xff]
    %v588 = vld [vmem:[%s3 + $0xf8] sm:$0xff]
    %v589 = vld [vmem:[%s3 + $0x100] sm:$0xff]
    %v590 = vld [vmem:[%s3 + $0x108] sm:$0xff]
    %v591 = vld [vmem:[%s3 + $0x110] sm:$0xff]
    %v592 = vld [vmem:[%s3 + $0x118] sm:$0xff]
    %v593 = vld [vmem:[%s3 + $0x120] sm:$0xff]
    %v594 = vld [vmem:[%s3 + $0x128] sm:$0xff]
    %v595 = vld [vmem:[%s3 + $0x130] sm:$0xff]
    %v596 = vld [vmem:[%s3 + $0x138] sm:$0xff]
    %v597 = vld [vmem:[%s3 + $0x140] sm:$0xff]
    %v598 = vld [vmem:[%s3 + $0x148] sm:$0xff]
    %v599 = vld [vmem:[%s3 + $0x150] sm:$0xff]
    %v600 = vld [vmem:[%s3 + $0x158] sm:$0xff]
    %v601 = vld [vmem:[%s3 + $0x160] sm:$0xff]
    %v602 = vld [vmem:[%s3 + $0x168] sm:$0xff]
    %v603 = vld [vmem:[%s3 + $0x170] sm:$0xff]
    %v604 = vld [vmem:[%s3 + $0x178] sm:$0xff]
    %v605 = vld [vmem:[%s3 + $0x180] sm:$0xff]
    %v606 = vld [vmem:[%s3 + $0x188] sm:$0xff]
    %v607 = vld [vmem:[%s3 + $0x190] sm:$0xff]
    %v608 = vld [vmem:[%s3 + $0x198] sm:$0xff]
    %v609 = vld [vmem:[%s3 + $0x1a0] sm:$0xff]
    %v610 = vld [vmem:[%s3 + $0x1a8] sm:$0xff]
    %v611 = vld [vmem:[%s3 + $0x1b0] sm:$0xff]
    %v612 = vld [vmem:[%s3 + $0x1b8] sm:$0xff]
    %v613 = vld [vmem:[%s3 + $0x1c0] sm:$0xff]
    %v614 = vld [vmem:[%s3 + $0x1c8] sm:$0xff]
    %v615 = vld [vmem:[%s3 + $0x1d0] sm:$0xff]
    %v616 = vld [vmem:[%s3 + $0x1d8] sm:$0xff]
    %v617 = vld [vmem:[%s3 + $0x1e0] sm:$0xff]
    %v618 = vld [vmem:[%s3 + $0x1e8] sm:$0xff]
    %v619 = vld [vmem:[%s3 + $0x1f0] sm:$0xff]
    %v620 = vld [vmem:[%s3 + $0x1f8] sm:$0xff]
    %v621 = vld [vmem:[%s4] sm:$0xff]
    %v623 = vlaneseq
    %v624 = vshrl.u32 %v623, 7
    %v625 = vsub.s32 0, %v624
    %v626 = vrot.slane %v621, %v625
    %v627 = vlaneseq
    %v628 = vshrl.u32 %v627, 7
    %v629 = vsub.s32 1, %v628
    %v630 = vrot.slane %v621, %v629
    %v631 = vlaneseq
    %v632 = vshrl.u32 %v631, 7
    %v633 = vsub.s32 2, %v632
    %v634 = vrot.slane %v621, %v633
    %v635 = vlaneseq
    %v636 = vshrl.u32 %v635, 7
    %v637 = vsub.s32 3, %v636
    %v638 = vrot.slane %v621, %v637
    %v639 = vlaneseq
    %v640 = vshrl.u32 %v639, 7
    %v641 = vsub.s32 4, %v640
    %v642 = vrot.slane %v621, %v641
    %v643 = vlaneseq
    %v644 = vshrl.u32 %v643, 7
    %v645 = vsub.s32 5, %v644
    %v646 = vrot.slane %v621, %v645
    %v647 = vlaneseq
    %v648 = vshrl.u32 %v647, 7
    %v649 = vsub.s32 6, %v648
    %v650 = vrot.slane %v621, %v649
    %v651 = vlaneseq
    %v652 = vshrl.u32 %v651, 7
    %v653 = vsub.s32 7, %v652
    %v654 = vrot.slane %v621, %v653
    %v727 = vunpack.c.l.b16 %v557
    %v728 = vunpack.c.h.b16 %v557
    %v729 = vunpack.c.l.b16 %v558
    %v730 = vunpack.c.h.b16 %v558
    %v731 = vunpack.c.l.b16 %v559
    %v732 = vunpack.c.h.b16 %v559
    %v733 = vunpack.c.l.b16 %v560
    %v734 = vunpack.c.h.b16 %v560
    %v735 = vunpack.c.l.b16 %v561
    %v736 = vunpack.c.h.b16 %v561
    %v737 = vunpack.c.l.b16 %v562
    %v738 = vunpack.c.h.b16 %v562
    %v739 = vunpack.c.l.b16 %v563
    %v740 = vunpack.c.h.b16 %v563
    %v741 = vunpack.c.l.b16 %v564
    %v742 = vunpack.c.h.b16 %v564
    %v743 = vunpack.c.l.b16 %v565
    %v744 = vunpack.c.h.b16 %v565
    %v745 = vunpack.c.l.b16 %v566
    %v746 = vunpack.c.h.b16 %v566
    %v747 = vunpack.c.l.b16 %v567
    %v748 = vunpack.c.h.b16 %v567
    %v749 = vunpack.c.l.b16 %v568
    %v750 = vunpack.c.h.b16 %v568
    %v751 = vunpack.c.l.b16 %v569
    %v752 = vunpack.c.h.b16 %v569
    %v753 = vunpack.c.l.b16 %v570
    %v754 = vunpack.c.h.b16 %v570
    %v755 = vunpack.c.l.b16 %v571
    %v756 = vunpack.c.h.b16 %v571
    %v757 = vunpack.c.l.b16 %v572
    %v758 = vunpack.c.h.b16 %v572
    %v759 = vunpack.c.l.b16 %v573
    %v760 = vunpack.c.h.b16 %v573
    %v761 = vunpack.c.l.b16 %v574
    %v762 = vunpack.c.h.b16 %v574
    %v763 = vunpack.c.l.b16 %v575
    %v764 = vunpack.c.h.b16 %v575
    %v765 = vunpack.c.l.b16 %v576
    %v766 = vunpack.c.h.b16 %v576
    %v767 = vunpack.c.l.b16 %v577
    %v768 = vunpack.c.h.b16 %v577
    %v769 = vunpack.c.l.b16 %v578
    %v770 = vunpack.c.h.b16 %v578
    %v771 = vunpack.c.l.b16 %v579
    %v772 = vunpack.c.h.b16 %v579
    %v773 = vunpack.c.l.b16 %v580
    %v774 = vunpack.c.h.b16 %v580
    %v775 = vunpack.c.l.b16 %v581
    %v776 = vunpack.c.h.b16 %v581
    %v777 = vunpack.c.l.b16 %v582
    %v778 = vunpack.c.h.b16 %v582
    %v779 = vunpack.c.l.b16 %v583
    %v780 = vunpack.c.h.b16 %v583
    %v781 = vunpack.c.l.b16 %v584
    %v782 = vunpack.c.h.b16 %v584
    %v783 = vunpack.c.l.b16 %v585
    %v784 = vunpack.c.h.b16 %v585
    %v785 = vunpack.c.l.b16 %v586
    %v786 = vunpack.c.h.b16 %v586
    %v787 = vunpack.c.l.b16 %v587
    %v788 = vunpack.c.h.b16 %v587
    %v789 = vunpack.c.l.b16 %v588
    %v790 = vunpack.c.h.b16 %v588
    %v791 = vunpack.c.l.b16 %v589
    %v792 = vunpack.c.h.b16 %v589
    %v793 = vunpack.c.l.b16 %v590
    %v794 = vunpack.c.h.b16 %v590
    %v795 = vunpack.c.l.b16 %v591
    %v796 = vunpack.c.h.b16 %v591
    %v797 = vunpack.c.l.b16 %v592
    %v798 = vunpack.c.h.b16 %v592
    %v799 = vunpack.c.l.b16 %v593
    %v800 = vunpack.c.h.b16 %v593
    %v801 = vunpack.c.l.b16 %v594
    %v802 = vunpack.c.h.b16 %v594
    %v803 = vunpack.c.l.b16 %v595
    %v804 = vunpack.c.h.b16 %v595
    %v805 = vunpack.c.l.b16 %v596
    %v806 = vunpack.c.h.b16 %v596
    %v807 = vunpack.c.l.b16 %v597
    %v808 = vunpack.c.h.b16 %v597
    %v809 = vunpack.c.l.b16 %v598
    %v810 = vunpack.c.h.b16 %v598
    %v811 = vunpack.c.l.b16 %v599
    %v812 = vunpack.c.h.b16 %v599
    %v813 = vunpack.c.l.b16 %v600
    %v814 = vunpack.c.h.b16 %v600
    %v815 = vunpack.c.l.b16 %v601
    %v816 = vunpack.c.h.b16 %v601
    %v817 = vunpack.c.l.b16 %v602
    %v818 = vunpack.c.h.b16 %v602
    %v819 = vunpack.c.l.b16 %v603
    %v820 = vunpack.c.h.b16 %v603
    %v821 = vunpack.c.l.b16 %v604
    %v822 = vunpack.c.h.b16 %v604
    %v823 = vunpack.c.l.b16 %v605
    %v824 = vunpack.c.h.b16 %v605
    %v825 = vunpack.c.l.b16 %v606
    %v826 = vunpack.c.h.b16 %v606
    %v827 = vunpack.c.l.b16 %v607
    %v828 = vunpack.c.h.b16 %v607
    %v829 = vunpack.c.l.b16 %v608
    %v830 = vunpack.c.h.b16 %v608
    %v831 = vunpack.c.l.b16 %v609
    %v832 = vunpack.c.h.b16 %v609
    %v833 = vunpack.c.l.b16 %v610
    %v834 = vunpack.c.h.b16 %v610
    %v835 = vunpack.c.l.b16 %v611
    %v836 = vunpack.c.h.b16 %v611
    %v837 = vunpack.c.l.b16 %v612
    %v838 = vunpack.c.h.b16 %v612
    %v839 = vunpack.c.l.b16 %v613
    %v840 = vunpack.c.h.b16 %v613
    %v841 = vunpack.c.l.b16 %v614
    %v842 = vunpack.c.h.b16 %v614
    %v843 = vunpack.c.l.b16 %v615
    %v844 = vunpack.c.h.b16 %v615
    %v845 = vunpack.c.l.b16 %v616
    %v846 = vunpack.c.h.b16 %v616
    %v847 = vunpack.c.l.b16 %v617
    %v848 = vunpack.c.h.b16 %v617
    %v849 = vunpack.c.l.b16 %v618
    %v850 = vunpack.c.h.b16 %v618
    %v851 = vunpack.c.l.b16 %v619
    %v852 = vunpack.c.h.b16 %v619
    %v853 = vunpack.c.l.b16 %v620
    %v854 = vunpack.c.h.b16 %v620
    %v855 = vpack.c.b16 %v735, %v727
    %v856 = vpack.c.b16 %v736, %v728
    %v857 = vpack.c.b16 %v737, %v729
    %v858 = vpack.c.b16 %v738, %v730
    %v859 = vpack.c.b16 %v739, %v731
    %v860 = vpack.c.b16 %v740, %v732
    %v861 = vpack.c.b16 %v741, %v733
    %v862 = vpack.c.b16 %v742, %v734
    %v863 = vpack.c.b16 %v751, %v743
    %v864 = vpack.c.b16 %v752, %v744
    %v865 = vpack.c.b16 %v753, %v745
    %v866 = vpack.c.b16 %v754, %v746
    %v867 = vpack.c.b16 %v755, %v747
    %v868 = vpack.c.b16 %v756, %v748
    %v869 = vpack.c.b16 %v757, %v749
    %v870 = vpack.c.b16 %v758, %v750
    %v871 = vpack.c.b16 %v767, %v759
    %v872 = vpack.c.b16 %v768, %v760
    %v873 = vpack.c.b16 %v769, %v761
    %v874 = vpack.c.b16 %v770, %v762
    %v875 = vpack.c.b16 %v771, %v763
    %v876 = vpack.c.b16 %v772, %v764
    %v877 = vpack.c.b16 %v773, %v765
    %v878 = vpack.c.b16 %v774, %v766
    %v879 = vpack.c.b16 %v783, %v775
    %v880 = vpack.c.b16 %v784, %v776
    %v881 = vpack.c.b16 %v785, %v777
    %v882 = vpack.c.b16 %v786, %v778
    %v883 = vpack.c.b16 %v787, %v779
    %v884 = vpack.c.b16 %v788, %v780
    %v885 = vpack.c.b16 %v789, %v781
    %v886 = vpack.c.b16 %v790, %v782
    %v887 = vpack.c.b16 %v799, %v791
    %v888 = vpack.c.b16 %v800, %v792
    %v889 = vpack.c.b16 %v801, %v793
    %v890 = vpack.c.b16 %v802, %v794
    %v891 = vpack.c.b16 %v803, %v795
    %v892 = vpack.c.b16 %v804, %v796
    %v893 = vpack.c.b16 %v805, %v797
    %v894 = vpack.c.b16 %v806, %v798
    %v895 = vpack.c.b16 %v815, %v807
    %v896 = vpack.c.b16 %v816, %v808
    %v897 = vpack.c.b16 %v817, %v809
    %v898 = vpack.c.b16 %v818, %v810
    %v899 = vpack.c.b16 %v819, %v811
    %v900 = vpack.c.b16 %v820, %v812
    %v901 = vpack.c.b16 %v821, %v813
    %v902 = vpack.c.b16 %v822, %v814
    %v903 = vpack.c.b16 %v831, %v823
    %v904 = vpack.c.b16 %v832, %v824
    %v905 = vpack.c.b16 %v833, %v825
    %v906 = vpack.c.b16 %v834, %v826
    %v907 = vpack.c.b16 %v835, %v827
    %v908 = vpack.c.b16 %v836, %v828
    %v909 = vpack.c.b16 %v837, %v829
    %v910 = vpack.c.b16 %v838, %v830
    %v911 = vpack.c.b16 %v847, %v839
    %v912 = vpack.c.b16 %v848, %v840
    %v913 = vpack.c.b16 %v849, %v841
    %v914 = vpack.c.b16 %v850, %v842
    %v915 = vpack.c.b16 %v851, %v843
    %v916 = vpack.c.b16 %v852, %v844
    %v917 = vpack.c.b16 %v853, %v845
    %v918 = vpack.c.b16 %v854, %v846
    %983 = vmatprep.subr.bf16.mxu0 %v912
    %984 = vmatpush1.bf16.msra.mxu0 %v911
    %985 = vmatprep.subr.bf16.mxu0 %v904
    %986 = vmatpush1.bf16.msra.mxu0 %v903
    %987 = vmatprep.subr.bf16.mxu0 %v896
    %988 = vmatpush1.bf16.msra.mxu0 %v895
    %989 = vmatprep.subr.bf16.mxu0 %v888
    %990 = vmatpush1.bf16.msra.mxu0 %v887
    %991 = vmatprep.subr.bf16.mxu0 %v880
    %992 = vmatpush1.bf16.msra.mxu0 %v879
    %993 = vmatprep.subr.bf16.mxu0 %v872
    %994 = vmatpush1.bf16.msra.mxu0 %v871
    %995 = vmatprep.subr.bf16.mxu0 %v864
    %996 = vmatpush1.bf16.msra.mxu0 %v863
    %997 = vmatprep.subr.bf16.mxu0 %v856
    %998 = vmatpush1.bf16.msra.mxu0 %v855
    %999 = vmatprep.subr.bf16.mxu0 0
    %1000 = vmatpush2.bf16.msra.mxu0 0
    %1001 = vmatprep.subr.bf16.mxu0 0
    %1002 = vmatpush2.bf16.msra.mxu0 0
    %1003 = vmatprep.subr.bf16.mxu0 0
    %1004 = vmatpush2.bf16.msra.mxu0 0
    %1005 = vmatprep.subr.bf16.mxu0 0
    %1006 = vmatpush2.bf16.msra.mxu0 0
    %1007 = vmatprep.subr.bf16.mxu0 0
    %1008 = vmatpush2.bf16.msra.mxu0 0
    %1009 = vmatprep.subr.bf16.mxu0 0
    %1010 = vmatpush2.bf16.msra.mxu0 0
    %1011 = vmatprep.subr.bf16.mxu0 0
    %1012 = vmatpush2.bf16.msra.mxu0 0
    %1013 = vmatprep.subr.bf16.mxu0 0
    %1014 = vmatpush2.bf16.msra.mxu0 0
    %1015 = vmatprep.mubr.bf16.mxu0 0
    %1016 = vmatmul.mubr.bf16.gmra.mxu0 %v556
    %v1017 = vpop.f32.mrf.mxu0
    %v1018 = vadd.f32 %v626, %v1017
    %v1019 = vpop.f32.mrf.mxu0
    %v1020 = vadd.f32 %v630, %v1019
    %v1021 = vpop.f32.mrf.mxu0
    %v1022 = vadd.f32 %v626, %v1021
    %v1023 = vpop.f32.mrf.mxu0
    %v1024 = vadd.f32 %v630, %v1023
    %1025 = vdwg.mxu0
    %1026 = vmatprep.subr.bf16.mxu0 %v914
    %1027 = vmatpush1.bf16.msra.mxu0 %v913
    %1028 = vmatprep.subr.bf16.mxu0 %v906
    %1029 = vmatpush1.bf16.msra.mxu0 %v905
    %1030 = vmatprep.subr.bf16.mxu0 %v898
    %1031 = vmatpush1.bf16.msra.mxu0 %v897
    %1032 = vmatprep.subr.bf16.mxu0 %v890
    %1033 = vmatpush1.bf16.msra.mxu0 %v889
    %1034 = vmatprep.subr.bf16.mxu0 %v882
    %1035 = vmatpush1.bf16.msra.mxu0 %v881
    %1036 = vmatprep.subr.bf16.mxu0 %v874
    %1037 = vmatpush1.bf16.msra.mxu0 %v873
    %1038 = vmatprep.subr.bf16.mxu0 %v866
    %1039 = vmatpush1.bf16.msra.mxu0 %v865
    %1040 = vmatprep.subr.bf16.mxu0 %v858
    %1041 = vmatpush1.bf16.msra.mxu0 %v857
    %1042 = vmatprep.subr.bf16.mxu0 0
    %1043 = vmatpush2.bf16.msra.mxu0 0
    %1044 = vmatprep.subr.bf16.mxu0 0
    %1045 = vmatpush2.bf16.msra.mxu0 0
    %1046 = vmatprep.subr.bf16.mxu0 0
    %1047 = vmatpush2.bf16.msra.mxu0 0
    %1048 = vmatprep.subr.bf16.mxu0 0
    %1049 = vmatpush2.bf16.msra.mxu0 0
    %1050 = vmatprep.subr.bf16.mxu0 0
    %1051 = vmatpush2.bf16.msra.mxu0 0
    %1052 = vmatprep.subr.bf16.mxu0 0
    %1053 = vmatpush2.bf16.msra.mxu0 0
    %1054 = vmatprep.subr.bf16.mxu0 0
    %1055 = vmatpush2.bf16.msra.mxu0 0
    %1056 = vmatprep.subr.bf16.mxu0 0
    %1057 = vmatpush2.bf16.msra.mxu0 0
    %1058 = vmatprep.mubr.bf16.mxu0 0
    %1059 = vmatmul.mubr.bf16.gmra.mxu0 %v556
    %v1060 = vpop.f32.mrf.mxu0
    %v1061 = vadd.f32 %v634, %v1060
    %v1062 = vpop.f32.mrf.mxu0
    %v1063 = vadd.f32 %v638, %v1062
    %v1064 = vpop.f32.mrf.mxu0
    %v1065 = vadd.f32 %v634, %v1064
    %v1066 = vpop.f32.mrf.mxu0
    %v1067 = vadd.f32 %v638, %v1066
    %1068 = vdwg.mxu0
    %1069 = vmatprep.subr.bf16.mxu0 %v916
    %1070 = vmatpush1.bf16.msra.mxu0 %v915
    %1071 = vmatprep.subr.bf16.mxu0 %v908
    %1072 = vmatpush1.bf16.msra.mxu0 %v907
    %1073 = vmatprep.subr.bf16.mxu0 %v900
    %1074 = vmatpush1.bf16.msra.mxu0 %v899
    %1075 = vmatprep.subr.bf16.mxu0 %v892
    %1076 = vmatpush1.bf16.msra.mxu0 %v891
    %1077 = vmatprep.subr.bf16.mxu0 %v884
    %1078 = vmatpush1.bf16.msra.mxu0 %v883
    %1079 = vmatprep.subr.bf16.mxu0 %v876
    %1080 = vmatpush1.bf16.msra.mxu0 %v875
    %1081 = vmatprep.subr.bf16.mxu0 %v868
    %1082 = vmatpush1.bf16.msra.mxu0 %v867
    %1083 = vmatprep.subr.bf16.mxu0 %v860
    %1084 = vmatpush1.bf16.msra.mxu0 %v859
    %1085 = vmatprep.subr.bf16.mxu0 0
    %1086 = vmatpush2.bf16.msra.mxu0 0
    %1087 = vmatprep.subr.bf16.mxu0 0
    %1088 = vmatpush2.bf16.msra.mxu0 0
    %1089 = vmatprep.subr.bf16.mxu0 0
    %1090 = vmatpush2.bf16.msra.mxu0 0
    %1091 = vmatprep.subr.bf16.mxu0 0
    %1092 = vmatpush2.bf16.msra.mxu0 0
    %1093 = vmatprep.subr.bf16.mxu0 0
    %1094 = vmatpush2.bf16.msra.mxu0 0
    %1095 = vmatprep.subr.bf16.mxu0 0
    %1096 = vmatpush2.bf16.msra.mxu0 0
    %1097 = vmatprep.subr.bf16.mxu0 0
    %1098 = vmatpush2.bf16.msra.mxu0 0
    %1099 = vmatprep.subr.bf16.mxu0 0
    %1100 = vmatpush2.bf16.msra.mxu0 0
    %1101 = vmatprep.mubr.bf16.mxu0 0
    %1102 = vmatmul.mubr.bf16.gmra.mxu0 %v556
    %v1103 = vpop.f32.mrf.mxu0
    %v1104 = vadd.f32 %v642, %v1103
    %v1105 = vpop.f32.mrf.mxu0
    %v1106 = vadd.f32 %v646, %v1105
    %v1107 = vpop.f32.mrf.mxu0
    %v1108 = vadd.f32 %v642, %v1107
    %v1109 = vpop.f32.mrf.mxu0
    %v1110 = vadd.f32 %v646, %v1109
    %1111 = vdwg.mxu0
    %1112 = vmatprep.subr.bf16.mxu0 %v918
    %1113 = vmatpush1.bf16.msra.mxu0 %v917
    %1114 = vmatprep.subr.bf16.mxu0 %v910
    %1115 = vmatpush1.bf16.msra.mxu0 %v909
    %1116 = vmatprep.subr.bf16.mxu0 %v902
    %1117 = vmatpush1.bf16.msra.mxu0 %v901
    %1118 = vmatprep.subr.bf16.mxu0 %v894
    %1119 = vmatpush1.bf16.msra.mxu0 %v893
    %1120 = vmatprep.subr.bf16.mxu0 %v886
    %1121 = vmatpush1.bf16.msra.mxu0 %v885
    %1122 = vmatprep.subr.bf16.mxu0 %v878
    %1123 = vmatpush1.bf16.msra.mxu0 %v877
    %1124 = vmatprep.subr.bf16.mxu0 %v870
    %1125 = vmatpush1.bf16.msra.mxu0 %v869
    %1126 = vmatprep.subr.bf16.mxu0 %v862
    %1127 = vmatpush1.bf16.msra.mxu0 %v861
    %1128 = vmatprep.subr.bf16.mxu0 0
    %1129 = vmatpush2.bf16.msra.mxu0 0
    %1130 = vmatprep.subr.bf16.mxu0 0
    %1131 = vmatpush2.bf16.msra.mxu0 0
    %1132 = vmatprep.subr.bf16.mxu0 0
    %1133 = vmatpush2.bf16.msra.mxu0 0
    %1134 = vmatprep.subr.bf16.mxu0 0
    %1135 = vmatpush2.bf16.msra.mxu0 0
    %1136 = vmatprep.subr.bf16.mxu0 0
    %1137 = vmatpush2.bf16.msra.mxu0 0
    %1138 = vmatprep.subr.bf16.mxu0 0
    %1139 = vmatpush2.bf16.msra.mxu0 0
    %1140 = vmatprep.subr.bf16.mxu0 0
    %1141 = vmatpush2.bf16.msra.mxu0 0
    %1142 = vmatprep.subr.bf16.mxu0 0
    %1143 = vmatpush2.bf16.msra.mxu0 0
    %1144 = vmatprep.mubr.bf16.mxu0 0
    %1145 = vmatmul.mubr.bf16.gmra.mxu0 %v556
    %v1146 = vpop.f32.mrf.mxu0
    %v1147 = vadd.f32 %v650, %v1146
    %v1148 = vpop.f32.mrf.mxu0
    %v1149 = vadd.f32 %v654, %v1148
    %v1150 = vpop.f32.mrf.mxu0
    %v1151 = vadd.f32 %v650, %v1150
    %v1152 = vpop.f32.mrf.mxu0
    %v1153 = vadd.f32 %v654, %v1152
    %1154 = vdwg.mxu0
    %1155 = vst [vmem:[#allocation2] sm:$0xff] %v1018
    %1156 = vst [vmem:[#allocation2 + $0x8] sm:$0xff] %v1020
    %1157 = vst [vmem:[#allocation2 + $0x10] sm:$0xff] %v1061
    %1158 = vst [vmem:[#allocation2 + $0x18] sm:$0xff] %v1063
    %1159 = vst [vmem:[#allocation2 + $0x20] sm:$0xff] %v1104
    %1160 = vst [vmem:[#allocation2 + $0x28] sm:$0xff] %v1106
    %1161 = vst [vmem:[#allocation2 + $0x30] sm:$0xff] %v1147
    %vm1162 = vcmask 850944
    %1163 = vst.msk [vmem:[#allocation2 + $0x38] sm:$0xff] %vm1162, %v1149
    %1164 = vst [vmem:[#allocation2 + $0x40] sm:$0xff] %v1022
    %1165 = vst [vmem:[#allocation2 + $0x48] sm:$0xff] %v1024
    %1166 = vst [vmem:[#allocation2 + $0x50] sm:$0xff] %v1065
    %1167 = vst [vmem:[#allocation2 + $0x58] sm:$0xff] %v1067
    %1168 = vst [vmem:[#allocation2 + $0x60] sm:$0xff] %v1108
    %1169 = vst [vmem:[#allocation2 + $0x68] sm:$0xff] %v1110
    %1170 = vst [vmem:[#allocation2 + $0x70] sm:$0xff] %v1151
    %1171 = vst.msk [vmem:[#allocation2 + $0x78] sm:$0xff] %vm1162, %v1153
    // Predicated region
    $region22: #{tpu_custom_call.1} parent=1 // pred_check
      _
    $region23: #{tpu_custom_call.1} parent=1 // pred_check_branch
      %1173 = sbr.rel (0) target = $region25
    $region24: #{tpu_custom_call.1} parent=1 // pred_region
      %s1175 = ssub.s32 2048, 2048
      %1176 = vsyncadd [#allocation3], %s1175
      %s1177 = sshll.u32 [#allocation2], 4
      %s1178 = int_to_ptr.vmem [resolvable:$true] %s1177
      %1183 = dma.vmem_to_hbm [thread:$0]  %s1178, 2048, %s5, [#allocation3], 1024, 1024, 64
    $region25: #{tpu_custom_call.1} parent=1 // pred_fallthru
      _
    // Predicated region
    $region26: #{tpu_custom_call.1} parent=1 // pred_check
      _
    $region27: #{tpu_custom_call.1} parent=1 // pred_check_branch
      %1185 = sbr.rel (0) target = $region29
    $region28: #{tpu_custom_call.1} parent=1 // pred_region
      %1186 = dma.done [#allocation3], 2048
    $region29: #{tpu_custom_call.1} parent=1 // pred_fallthru
      _
    %1187 = vsyncpa [#allocation3], 1

</llo_original>
